<compile_context>
chip_gen: v7x
topology: tpu7x:2x2x1
jax: 0.10.0
libtpu: 0.0.40
codegen_flags: <defaults>
</compile_context>

<pallas_src>
import functools

import jax
import jax.numpy as jnp
import numpy as np
from jax import lax
from jax.experimental import pallas as pl
from jax.experimental.pallas import tpu as pltpu

_LANES = 128
_ROW_ALIGN = 32  # keeps int8 (32,128) and f32 (8,128) partial blocks tile-aligned


def _cdiv(a, b):
    return (a + b - 1) // b


def _round_up(a, b):
    return _cdiv(a, b) * b


def _default_num_cores():
    """2 on chips with two TensorCores (megacore / v7x), else 1."""
    try:
        kind = jax.devices()[0].device_kind.lower()
    except Exception:
        return 1
    if any(s in kind for s in ("v7", "7x", "v4", "v5p")):
        return 2
    return 1


def _ce_sum_kernel(x_ref, t_ref, o_ref, acc_ref, *, rows_data, bm, nb_per_core):
    # x_ref  : (3, bm, 128) f32   class-major, sublane/lane-dense logits
    # t_ref  : (bm, 128)    int8  targets (ignore_index / padding remapped to -1)
    # o_ref  : (1, 8, 128)  f32   per-core partial sum (replicated over the tile)
    # acc_ref: (bm, 128)    f32   running per-position partial sums (VMEM scratch)
    c = pl.program_id(0)
    i = pl.program_id(1)

    @pl.when(i == 0)
    def _init():
        acc_ref[...] = jnp.zeros_like(acc_ref)

    # Dense (bm, 128) tiles -> everything below is full-vreg VPU/EUP work.
    x0 = x_ref[0]
    x1 = x_ref[1]
    x2 = x_ref[2]
    t = t_ref[...].astype(jnp.float32)          # int8 -> f32 widen (exact for small ints)

    # Numerically stable log-sum-exp pieces.
    m = jnp.maximum(jnp.maximum(x0, x1), x2)
    z0 = x0 - m
    z1 = x1 - m
    z2 = x2 - m
    lse = jnp.log(jnp.exp(z0) + jnp.exp(z1) + jnp.exp(z2))

    # -scale[cls] * log_softmax(x)[cls] with scale = [1,2,3]; negation folded:
    #   = scale[cls] * (lse - z_cls)
    nll0 = lse - z0
    nll1 = 2.0 * (lse - z1)
    nll2 = 3.0 * (lse - z2)

    # Target pick via two selects (no one-hot / iota / axis reduce).
    # NOTE: targets outside {0,1,2} that are not ignore_index silently pick
    # class 2 here; PyTorch would raise for such (invalid) inputs.
    picked = jnp.where(t == 0.0, nll0, jnp.where(t == 1.0, nll1, nll2))

    # Masking (select, so garbage/NaN in masked lanes never propagates):
    #   (a) rows past the data extent -- ragged last block and idle clamped
    #       steps -- via a row-iota compare against the static data row count;
    #   (b) ignore_index and in-bounds lane padding via t == -1.
    blk = c * nb_per_core + i                      # unclamped block id of this step
    row = lax.broadcasted_iota(jnp.int32, (bm, _LANES), 0)
    keep = (row < rows_data - blk * bm) & (t != -1.0)
    acc_ref[...] += jnp.where(keep, picked, 0.0)

    @pl.when(i == pl.num_programs(1) - 1)
    def _finalize():
        partial = jnp.sum(acc_ref[...])            # single cross-lane reduce per core
        o_ref[...] = jnp.broadcast_to(partial, o_ref.shape).astype(o_ref.dtype)


def cross_entropy_loss_sum(x, target, ignore_index=-100, block_rows=2048,
                           num_cores=None):
    """Pallas implementation of the reference CrossEntropyLoss.forward (sum)."""
    N, C = x.shape
    assert C == 3, "reference multiplies log_softmax by a length-3 vector; C must be 3"
    if num_cores is None:
        num_cores = _default_num_cores()
    num_cores = max(1, int(num_cores))

    # Row geometry: samples -> (rows, 128); rows aligned to 32 so every block
    # offset/extent is tile-aligned for both f32 and int8 operands.
    rows = _round_up(_cdiv(max(N, 1), _LANES), _ROW_ALIGN)
    n_pad = rows * _LANES

    # Layout plumbing (class-major + dense (rows,128) view). Pads are tiny
    # (< 4096 samples) and fuse with the transpose pass.
    xT = jnp.transpose(x.astype(jnp.float32))                    # (3, N)
    xT = jnp.pad(xT, ((0, 0), (0, n_pad - N)))                   # finite zeros
    x3 = xT.reshape(3, rows, _LANES)

    t8 = jnp.where(target == ignore_index, -1, target).astype(jnp.int8)
    t8 = jnp.pad(t8, (0, n_pad - N), constant_values=-1).reshape(rows, _LANES)

    # Block size: multiple of 32 rows, no larger than the problem.
    bm = min(int(block_rows), rows)
    bm = max(_ROW_ALIGN, (bm // _ROW_ALIGN) * _ROW_ALIGN)
    nb_total = _cdiv(rows, bm)                 # real row-blocks
    nb_per_core = _cdiv(nb_total, num_cores)   # inner grid steps per core

    def blk_idx(c, i):
        # Clamp so idle trailing steps re-read the last valid block; their
        # contribution is masked to zero in-kernel (row >= rows_data).
        return jnp.minimum(c * nb_per_core + i, nb_total - 1)

    kernel = functools.partial(_ce_sum_kernel, rows_data=rows, bm=bm,
                               nb_per_core=nb_per_core)

    out = pl.pallas_call(
        kernel,
        out_shape=jax.ShapeDtypeStruct((num_cores, 8, 128), jnp.float32),
        grid_spec=pltpu.PrefetchScalarGridSpec(
            num_scalar_prefetch=0,
            grid=(num_cores, nb_per_core),
            in_specs=[
                pl.BlockSpec((3, bm, _LANES), lambda c, i: (0, blk_idx(c, i), 0)),
                pl.BlockSpec((bm, _LANES), lambda c, i: (blk_idx(c, i), 0)),
            ],
            out_specs=pl.BlockSpec((1, 8, 128), lambda c, i: (c, 0, 0)),
            scratch_shapes=[pltpu.VMEM((bm, _LANES), jnp.float32)],
        ),
        compiler_params=pltpu.CompilerParams(
            dimension_semantics=("parallel", "arbitrary"),
        ),
    )(x3, t8)

    # Per-core partials (each replicated across its (8,128) tile) -> scalar loss.
    return jnp.sum(out[:, 0, 0])


def _reference(x, target, ignore_index=-100):
    # Pure-JAX mirror of the PyTorch reference.
    logp = jax.nn.log_softmax(x.astype(jnp.float32), axis=1)
    scaled = jnp.array([1.0, 2.0, 3.0], jnp.float32) * logp
    valid = target != ignore_index
    safe_t = jnp.where(valid, target, 0)
    picked = jnp.take_along_axis(scaled, safe_t[:, None], axis=1)[:, 0]
    return jnp.sum(jnp.where(valid, -picked, 0.0))


if __name__ == "__main__":
    key = jax.random.PRNGKey(0)
    kx, kt, kx2, kt2 = jax.random.split(key, 4)

    # Small demo: N samples, C=3 classes (the [1,2,3] broadcast fixes C=3).
    N, C = 8, 3
    x = jax.random.normal(kx, (N, C), dtype=jnp.float32)
    target = jax.random.randint(kt, (N,), 0, C, dtype=jnp.int32)
    target = target.at[2].set(-100)            # exercise ignore_index masking

    loss = cross_entropy_loss_sum(x, target)
    jax.block_until_ready(loss)
    np.testing.assert_allclose(np.asarray(loss), np.asarray(_reference(x, target)),
                               rtol=1e-5, atol=1e-5)

    # Multi-block check: small block_rows + explicit 2-core grid exercises the
    # pipelined accumulation, the ragged (partial) last block, the clamped idle
    # step on the second core, lane padding and ignore_index together.
    N2 = 20000
    x2 = jax.random.normal(kx2, (N2, C), dtype=jnp.float32)
    t2 = jax.random.randint(kt2, (N2,), 0, C, dtype=jnp.int32)
    t2 = t2.at[7].set(-100)
    loss2 = cross_entropy_loss_sum(x2, t2, block_rows=64, num_cores=2)
    jax.block_until_ready(loss2)
    np.testing.assert_allclose(np.asarray(loss2), np.asarray(_reference(x2, t2)),
                               rtol=1e-4, atol=1e-4)

    print("KERNEL_OK")
</pallas_src>

<mosaic_0001>
module attributes {stable_mosaic.version = 11 : i64} {
  func.func @_ce_sum_kernel(%arg0: i32, %arg1: i32, %arg2: memref<3x32x128xf32, #tpu.memory_space<vmem>>, %arg3: memref<32x128xi8, #tpu.memory_space<vmem>>, %arg4: memref<1x8x128xf32, #tpu.memory_space<vmem>>, %arg5: memref<32x128xf32, #tpu.memory_space<vmem>>) attributes {dimension_semantics = [#tpu.dimension_semantics<parallel>, #tpu.dimension_semantics<arbitrary>], iteration_bounds = array<i64: 1, 1>, scalar_prefetch = 0 : i64, scratch_operands = 1 : i64, tpu.core_type = #tpu.core_type<tc>, window_params = [{transform_indices = @transform_0, window_bounds = array<i64: 3, 32, 128>}, {transform_indices = @transform_1, window_bounds = array<i64: 32, 128>}, {transform_indices = @transform_2, window_bounds = array<i64: 1, 8, 128>}]} {
    %c0_i32 = arith.constant 0 : i32
    %0 = arith.cmpi eq, %arg1, %c0_i32 : i32
    %1 = arith.extui %0 : i1 to i32
    %c0_i32_0 = arith.constant 0 : i32
    %2 = arith.cmpi ne, %1, %c0_i32_0 : i32
    scf.if %2 {
      %cst_21 = arith.constant 0.000000e+00 : f32
      %53 = vector.broadcast %cst_21 : f32 to vector<32x128xf32>
      %c0_22 = arith.constant 0 : index
      %c0_23 = arith.constant 0 : index
      %54 = vector.load %arg5[%c0_22, %c0_23] : memref<32x128xf32, #tpu.memory_space<vmem>>, vector<32x128xf32>
      tpu.vector_store %arg5[%c0_22, %c0_23], %53 {strides = array<i32>} : memref<32x128xf32, #tpu.memory_space<vmem>>, vector<32x128xf32>,
    } else {
    }
    %c0 = arith.constant 0 : index
    %c0_1 = arith.constant 0 : index
    %c0_2 = arith.constant 0 : index
    %3 = vector.load %arg2[%c0, %c0_1, %c0_2] : memref<3x32x128xf32, #tpu.memory_space<vmem>>, vector<1x32x128xf32>
    %4 = vector.shape_cast %3 : vector<1x32x128xf32> to vector<32x128xf32>
    %c1 = arith.constant 1 : index
    %c0_3 = arith.constant 0 : index
    %c0_4 = arith.constant 0 : index
    %5 = vector.load %arg2[%c1, %c0_3, %c0_4] : memref<3x32x128xf32, #tpu.memory_space<vmem>>, vector<1x32x128xf32>
    %6 = vector.shape_cast %5 : vector<1x32x128xf32> to vector<32x128xf32>
    %c2 = arith.constant 2 : index
    %c0_5 = arith.constant 0 : index
    %c0_6 = arith.constant 0 : index
    %7 = vector.load %arg2[%c2, %c0_5, %c0_6] : memref<3x32x128xf32, #tpu.memory_space<vmem>>, vector<1x32x128xf32>
    %8 = vector.shape_cast %7 : vector<1x32x128xf32> to vector<32x128xf32>
    %c0_7 = arith.constant 0 : index
    %c0_8 = arith.constant 0 : index
    %9 = vector.load %arg3[%c0_7, %c0_8] : memref<32x128xi8, #tpu.memory_space<vmem>>, vector<32x128xi8>
    %10 = arith.sitofp %9 : vector<32x128xi8> to vector<32x128xf32>
    %11 = arith.maximumf %4, %6 : vector<32x128xf32>
    %12 = arith.maximumf %11, %8 : vector<32x128xf32>
    %13 = arith.subf %4, %12 : vector<32x128xf32>
    %14 = arith.subf %6, %12 : vector<32x128xf32>
    %15 = arith.subf %8, %12 : vector<32x128xf32>
    %16 = math.exp %13 : vector<32x128xf32>
    %17 = math.exp %14 : vector<32x128xf32>
    %18 = arith.addf %16, %17 : vector<32x128xf32>
    %19 = math.exp %15 : vector<32x128xf32>
    %20 = arith.addf %18, %19 : vector<32x128xf32>
    %21 = math.log %20 : vector<32x128xf32>
    %22 = arith.subf %21, %13 : vector<32x128xf32>
    %23 = arith.subf %21, %14 : vector<32x128xf32>
    %cst = arith.constant 2.000000e+00 : f32
    %24 = vector.broadcast %cst : f32 to vector<32x128xf32>
    %25 = arith.mulf %24, %23 : vector<32x128xf32>
    %26 = arith.subf %21, %15 : vector<32x128xf32>
    %cst_9 = arith.constant 3.000000e+00 : f32
    %27 = vector.broadcast %cst_9 : f32 to vector<32x128xf32>
    %28 = arith.mulf %27, %26 : vector<32x128xf32>
    %cst_10 = arith.constant 0.000000e+00 : f32
    %29 = vector.broadcast %cst_10 : f32 to vector<32x128xf32>
    %30 = arith.cmpf oeq, %10, %29 : vector<32x128xf32>
    %cst_11 = arith.constant 1.000000e+00 : f32
    %31 = vector.broadcast %cst_11 : f32 to vector<32x128xf32>
    %32 = arith.cmpf oeq, %10, %31 : vector<32x128xf32>
    %33 = arith.select %32, %25, %28 : vector<32x128xi1>, vector<32x128xf32>
    %34 = arith.select %30, %22, %33 : vector<32x128xi1>, vector<32x128xf32>
    %c1_i32 = arith.constant 1 : i32
    %35 = arith.muli %arg0, %c1_i32 : i32
    %36 = arith.addi %35, %arg1 : i32
    %37 = tpu.iota {dimensions = array<i32: 0>} : vector<32x128xi32>
    %c32_i32 = arith.constant 32 : i32
    %38 = arith.muli %36, %c32_i32 : i32
    %c32_i32_12 = arith.constant 32 : i32
    %39 = arith.subi %c32_i32_12, %38 : i32
    %40 = vector.broadcast %39 : i32 to vector<32x128xi32>
    %41 = arith.cmpi slt, %37, %40 : vector<32x128xi32>
    %cst_13 = arith.constant -1.000000e+00 : f32
    %42 = vector.broadcast %cst_13 : f32 to vector<32x128xf32>
    %43 = arith.cmpf one, %10, %42 : vector<32x128xf32>
    %44 = arith.andi %41, %43 : vector<32x128xi1>
    %c0_14 = arith.constant 0 : index
    %c0_15 = arith.constant 0 : index
    %45 = vector.load %arg5[%c0_14, %c0_15] : memref<32x128xf32, #tpu.memory_space<vmem>>, vector<32x128xf32>
    %cst_16 = arith.constant 0.000000e+00 : f32
    %46 = vector.broadcast %cst_16 : f32 to vector<32x128xf32>
    %47 = arith.select %44, %34, %46 : vector<32x128xi1>, vector<32x128xf32>
    %48 = arith.addf %45, %47 : vector<32x128xf32>
    %c0_17 = arith.constant 0 : index
    %c0_18 = arith.constant 0 : index
    %49 = vector.load %arg5[%c0_17, %c0_18] : memref<32x128xf32, #tpu.memory_space<vmem>>, vector<32x128xf32>
    tpu.vector_store %arg5[%c0_17, %c0_18], %48 {strides = array<i32>} : memref<32x128xf32, #tpu.memory_space<vmem>>, vector<32x128xf32>,
    %c0_i32_19 = arith.constant 0 : i32
    %50 = arith.cmpi eq, %arg1, %c0_i32_19 : i32
    %51 = arith.extui %50 : i1 to i32
    %c0_i32_20 = arith.constant 0 : i32
    %52 = arith.cmpi ne, %51, %c0_i32_20 : i32
    scf.if %52 {
      %c0_21 = arith.constant 0 : index
      %c0_22 = arith.constant 0 : index
      %53 = vector.load %arg5[%c0_21, %c0_22] : memref<32x128xf32, #tpu.memory_space<vmem>>, vector<32x128xf32>
      %54 = vector.shape_cast %53 : vector<32x128xf32> to vector<1x32x128xf32>
      %cst_23 = arith.constant dense<0.000000e+00> : vector<1xf32>
      %55 = vector.multi_reduction <add>, %54, %cst_23 [1, 2] : vector<1x32x128xf32> to vector<1xf32>
      %56 = vector.shape_cast %55 : vector<1xf32> to vector<1x1x1xf32>
      %57 = vector.extract %56[0, 0, 0] : f32 from vector<1x1x1xf32>
      %58 = vector.broadcast %57 : f32 to vector<1x8x128xf32>
      %c0_24 = arith.constant 0 : index
      %c0_25 = arith.constant 0 : index
      %c0_26 = arith.constant 0 : index
      %59 = vector.load %arg4[%c0_24, %c0_25, %c0_26] : memref<1x8x128xf32, #tpu.memory_space<vmem>>, vector<1x8x128xf32>
      tpu.vector_store %arg4[%c0_24, %c0_25, %c0_26], %58 {strides = array<i32>} : memref<1x8x128xf32, #tpu.memory_space<vmem>>, vector<1x8x128xf32>,
    } else {
    }
    return
  }
  func.func @transform_0(%arg0: i32, %arg1: i32) -> (i32, i32, i32) {
    %c1_i32 = arith.constant 1 : i32
    %0 = arith.muli %arg0, %c1_i32 : i32
    %1 = arith.addi %0, %arg1 : i32
    %c0_i32 = arith.constant 0 : i32
    %2 = arith.minsi %1, %c0_i32 : i32
    %c0_i32_0 = arith.constant 0 : i32
    %c0_i32_1 = arith.constant 0 : i32
    %c0_i32_2 = arith.constant 0 : i32
    return %c0_i32_0, %2, %c0_i32_1 : i32, i32, i32
  }
  func.func @transform_1(%arg0: i32, %arg1: i32) -> (i32, i32) {
    %c1_i32 = arith.constant 1 : i32
    %0 = arith.muli %arg0, %c1_i32 : i32
    %1 = arith.addi %0, %arg1 : i32
    %c0_i32 = arith.constant 0 : i32
    %2 = arith.minsi %1, %c0_i32 : i32
    %c0_i32_0 = arith.constant 0 : i32
    %c0_i32_1 = arith.constant 0 : i32
    return %2, %c0_i32_0 : i32, i32
  }
  func.func @transform_2(%arg0: i32, %arg1: i32) -> (i32, i32, i32) {
    %c0_i32 = arith.constant 0 : i32
    %c0_i32_0 = arith.constant 0 : i32
    %c0_i32_1 = arith.constant 0 : i32
    return %arg0, %c0_i32, %c0_i32_0 : i32, i32, i32
  }
}

</mosaic_0001>

<llo_original>
// kernel: tpu_custom_call.1
$region0: #{tpu_custom_call.1}
  #allocation0 [shape = 'u32[]', space=smem, size = 0x4, offset = 0x4, fixed_abs, tag = 'smem constant byte address 0x4 - core index']
  #allocation1 [shape = 'u32[144,128]{1,0:T(1,128)}', space=vmem, size = 0x12000, scoped, tag = 'internal scratch']
  #allocation2 [shape = 'f32[32,128]{1,0:T(8,128)}', space=vmem, size = 0x4000, scoped, tag = 'scratch operand']
  %s0 = inlined_call_operand.hbm [shape: f32[3,32,128], index: 0, kind: input, shape index: {}]
  %s1 = inlined_call_operand.hbm [shape: s8[32,128], index: 1, kind: input, shape index: {}]
  %s2 = inlined_call_operand.hbm [shape: f32[1,8,128], index: 2, kind: output, shape index: {}]
  %s3 = sld [smem:[#allocation0]]
  $region34: #{tpu_custom_call.1} parent=0
    _
  %s5 = ssub.s32 1, %s3
  %s6 = scalar_select 0, %s5, %s3
  $region1: #{tpu_custom_call.1} parent=0
    #allocation3 [shape = 'u8[49152]{0}', space=vmem, size = 0xc000, scoped, tag = 'input window, operand 0, single buffered']
    #allocation4 [shape = 's32[1]{0}', space=sflag, size = 0x4, scoped, tag = 'scoped memory for tpu_custom_call.1']
    #allocation5 [shape = 's32[1]{0}', space=sflag, size = 0x4, scoped, tag = 'scoped memory for tpu_custom_call.1']
    #allocation6 [shape = 'u8[4096]{0}', space=vmem, size = 0x1000, scoped, tag = 'input window, operand 1, single buffered']
    #allocation7 [shape = 's32[1]{0}', space=sflag, size = 0x4, scoped, tag = 'scoped memory for tpu_custom_call.1']
    #allocation8 [shape = 'u8[4096]{0}', space=vmem, size = 0x1000, scoped, tag = 'output window, operand 0, single buffered']
    %7 = vsyncpa [#allocation4], 0
    %8 = vsyncpa [#allocation7], 0
    %9 = vsyncpa [#allocation5], 0
    // Predicated region
    $region2: #{tpu_custom_call.1} parent=1 // pred_check
      _
    $region3: #{tpu_custom_call.1} parent=1 // pred_check_branch
      %11 = sbr.rel (0) target = $region5
    $region4: #{tpu_custom_call.1} parent=1 // pred_region
      %s12 = sadd.s32 0, 0
      %p13 = scmp.lt.s32.totalorder %s12, 0
      %s14 = scalar_select %p13, %s12, 0
      %s15 = smul.u32 4, %s14
      %s17 = ssub.s32 1536, 1536
      %18 = vsyncadd [#allocation4], %s17
      %s19 = smul.addr %s15, 128
      %s20 = scalar_lea.hbm %s0, %s19
      %s21 = sshll.u32 [#allocation3], 4
      %s22 = int_to_ptr.vmem [resolvable:$true] %s21
      %27 = dma.hbm_to_vmem [thread:$0]  %s20, 1536, %s22, [#allocation4], 128, 128, 8
    $region5: #{tpu_custom_call.1} parent=1 // pred_fallthru
      _
    // Predicated region
    $region6: #{tpu_custom_call.1} parent=1 // pred_check
      _
    $region7: #{tpu_custom_call.1} parent=1 // pred_check_branch
      %29 = sbr.rel (0) target = $region9
    $region8: #{tpu_custom_call.1} parent=1 // pred_region
      %s30 = sadd.s32 0, 0
      %p31 = scmp.lt.s32.totalorder %s30, 0
      %s32 = scalar_select %p31, %s30, 0
      %s34 = ssub.s32 128, 128
      %35 = vsyncadd [#allocation7], %s34
      %s36 = smul.addr %s32, 128
      %s37 = scalar_lea.hbm %s1, %s36
      %s39 = sshll.u32 [#allocation6], 4
      %s40 = int_to_ptr.vmem [resolvable:$true] %s39
      %42 = dma.hbm_to_vmem [thread:$0]  %s37, 128, %s40, [#allocation7]
    $region9: #{tpu_custom_call.1} parent=1 // pred_fallthru
      _
    // Predicated region
    $region10: #{tpu_custom_call.1} parent=1 // pred_check
      _
    $region11: #{tpu_custom_call.1} parent=1 // pred_check_branch
      %44 = sbr.rel (0) target = $region13
    $region12: #{tpu_custom_call.1} parent=1 // pred_region
      %45 = dma.done [#allocation4], 1536
    $region13: #{tpu_custom_call.1} parent=1 // pred_fallthru
      _
    // Predicated region
    $region14: #{tpu_custom_call.1} parent=1 // pred_check
      _
    $region15: #{tpu_custom_call.1} parent=1 // pred_check_branch
      %47 = sbr.rel (0) target = $region17
    $region16: #{tpu_custom_call.1} parent=1 // pred_region
      %48 = dma.done [#allocation7], 128
    $region17: #{tpu_custom_call.1} parent=1 // pred_fallthru
      _
    %s49 = sadd.s32 0, 0
    %p50 = scmp.lt.s32.totalorder %s49, 0
    %s51 = scalar_select %p50, %s49, 0
    %s52 = smul.u32 4, %s51
    %s53 = sadd.s32 0, 0
    %p54 = scmp.lt.s32.totalorder %s53, 0
    %s55 = scalar_select %p54, %s53, 0
    %p56 = scmp.eq.s32.totalorder 0, 0
    // Predicated region
    $region18: #{tpu_custom_call.1} parent=1 // pred_check
      %p57 = pneg %p56
    $region19: #{tpu_custom_call.1} parent=1 // pred_check_branch
      %59 = sbr.rel (%p57) target = $region21
    $region20: #{tpu_custom_call.1} parent=1 // pred_region
      %60 = vst [vmem:[#allocation2] sm:$0xff] 0.0
      %61 = vst [vmem:[#allocation2 + $0x8] sm:$0xff] 0.0
      %62 = vst [vmem:[#allocation2 + $0x10] sm:$0xff] 0.0
      %63 = vst [vmem:[#allocation2 + $0x18] sm:$0xff] 0.0
    $region21: #{tpu_custom_call.1} parent=1 // pred_fallthru
      _
    %v64 = vld [vmem:[#allocation3] sm:$0xff]
    %v65 = vld [vmem:[#allocation3 + $0x8] sm:$0xff]
    %v66 = vld [vmem:[#allocation3 + $0x10] sm:$0xff]
    %v67 = vld [vmem:[#allocation3 + $0x18] sm:$0xff]
    %s68 = scalar_lea.vmem [#allocation3], 32
    %v69 = vld [vmem:[%s68] sm:$0xff]
    %v70 = vld [vmem:[%s68 + $0x8] sm:$0xff]
    %v71 = vld [vmem:[%s68 + $0x10] sm:$0xff]
    %v72 = vld [vmem:[%s68 + $0x18] sm:$0xff]
    %s73 = scalar_lea.vmem [#allocation3], 64
    %v74 = vld [vmem:[%s73] sm:$0xff]
    %v75 = vld [vmem:[%s73 + $0x8] sm:$0xff]
    %v76 = vld [vmem:[%s73 + $0x10] sm:$0xff]
    %v77 = vld [vmem:[%s73 + $0x18] sm:$0xff]
    %v78 = vld [vmem:[#allocation6] sm:$0xff]
    %v79 = vunpack.c.0.s8 %v78
    %v80 = vunpack.c.1.s8 %v78
    %v81 = vunpack.c.2.s8 %v78
    %v82 = vunpack.c.3.s8 %v78
    %v83 = vcvt.s32.f32 %v79
    %v84 = vcvt.s32.f32 %v80
    %v85 = vcvt.s32.f32 %v81
    %v86 = vcvt.s32.f32 %v82
    %v87 = vmax.f32 %v64, %v69
    %v88 = vmax.f32 %v65, %v70
    %v89 = vmax.f32 %v66, %v71
    %v90 = vmax.f32 %v67, %v72
    %v91 = vmax.f32 %v87, %v74
    %v92 = vmax.f32 %v88, %v75
    %v93 = vmax.f32 %v89, %v76
    %v94 = vmax.f32 %v90, %v77
    %v95 = vsub.f32 %v64, %v91
    %v96 = vsub.f32 %v65, %v92
    %v97 = vsub.f32 %v66, %v93
    %v98 = vsub.f32 %v67, %v94
    %v99 = vsub.f32 %v69, %v91
    %v100 = vsub.f32 %v70, %v92
    %v101 = vsub.f32 %v71, %v93
    %v102 = vsub.f32 %v72, %v94
    %v103 = vsub.f32 %v74, %v91
    %v104 = vsub.f32 %v75, %v92
    %v105 = vsub.f32 %v76, %v93
    %v106 = vsub.f32 %v77, %v94
    %v107 = vmul.f32 %v95, 1.442695
    %v108 = vpow.pop %v107
    %v109 = vmul.f32 %v96, 1.442695
    %v110 = vpow.pop %v109
    %v111 = vmul.f32 %v97, 1.442695
    %v112 = vpow.pop %v111
    %v113 = vmul.f32 %v98, 1.442695
    %v114 = vpow.pop %v113
    %v115 = vmul.f32 %v99, 1.442695
    %v116 = vpow.pop %v115
    %v117 = vmul.f32 %v100, 1.442695
    %v118 = vpow.pop %v117
    %v119 = vmul.f32 %v101, 1.442695
    %v120 = vpow.pop %v119
    %v121 = vmul.f32 %v102, 1.442695
    %v122 = vpow.pop %v121
    %v123 = vadd.f32 %v108, %v116
    %v124 = vadd.f32 %v110, %v118
    %v125 = vadd.f32 %v112, %v120
    %v126 = vadd.f32 %v114, %v122
    %v127 = vmul.f32 %v103, 1.442695
    %v128 = vpow.pop %v127
    %v129 = vmul.f32 %v104, 1.442695
    %v130 = vpow.pop %v129
    %v131 = vmul.f32 %v105, 1.442695
    %v132 = vpow.pop %v131
    %v133 = vmul.f32 %v106, 1.442695
    %v134 = vpow.pop %v133
    %v135 = vadd.f32 %v123, %v128
    %v136 = vadd.f32 %v124, %v130
    %v137 = vadd.f32 %v125, %v132
    %v138 = vadd.f32 %v126, %v134
    %v139 = vlog2.pop %v135
    %v140 = vmul.f32 %v139, 0.6931472
    %v141 = vlog2.pop %v136
    %v142 = vmul.f32 %v141, 0.6931472
    %v143 = vlog2.pop %v137
    %v144 = vmul.f32 %v143, 0.6931472
    %v145 = vlog2.pop %v138
    %v146 = vmul.f32 %v145, 0.6931472
    %v147 = vsub.f32 %v140, %v95
    %v148 = vsub.f32 %v142, %v96
    %v149 = vsub.f32 %v144, %v97
    %v150 = vsub.f32 %v146, %v98
    %v151 = vsub.f32 %v140, %v99
    %v152 = vsub.f32 %v142, %v100
    %v153 = vsub.f32 %v144, %v101
    %v154 = vsub.f32 %v146, %v102
    %v155 = vmul.f32 %v151, 2.0
    %v156 = vmul.f32 %v152, 2.0
    %v157 = vmul.f32 %v153, 2.0
    %v158 = vmul.f32 %v154, 2.0
    %v159 = vsub.f32 %v140, %v103
    %v160 = vsub.f32 %v142, %v104
    %v161 = vsub.f32 %v144, %v105
    %v162 = vsub.f32 %v146, %v106
    %v163 = vmul.f32 %v159, 3.0
    %v164 = vmul.f32 %v160, 3.0
    %v165 = vmul.f32 %v161, 3.0
    %v166 = vmul.f32 %v162, 3.0
    %vm167 = vcmp.eq.f32.partialorder %v83, 0.0
    %vm168 = vcmp.eq.f32.partialorder %v84, 0.0
    %vm169 = vcmp.eq.f32.partialorder %v85, 0.0
    %vm170 = vcmp.eq.f32.partialorder %v86, 0.0
    %vm171 = vcmp.eq.f32.partialorder %v83, 1.0
    %vm172 = vcmp.eq.f32.partialorder %v84, 1.0
    %vm173 = vcmp.eq.f32.partialorder %v85, 1.0
    %vm174 = vcmp.eq.f32.partialorder %v86, 1.0
    %v175 = vsel %vm171, %v155, %v163
    %v176 = vsel %vm172, %v156, %v164
    %v177 = vsel %vm173, %v157, %v165
    %v178 = vsel %vm174, %v158, %v166
    %v179 = vsel %vm167, %v147, %v175
    %v180 = vsel %vm168, %v148, %v176
    %v181 = vsel %vm169, %v149, %v177
    %v182 = vsel %vm170, %v150, %v178
    %s183 = sadd.s32 0, 0
    %v184 = vlaneseq
    %v185 = vshrl.u32 %v184, 7
    %v186 = vadd.s32 %v185, 8
    %v187 = vadd.s32 %v185, 16
    %v188 = vadd.s32 %v185, 24
    %s189 = smul.u32 %s183, 32
    %s190 = ssub.s32 32, %s189
    %v191 = vstv %s190
    %vm192 = vcmp.lt.s32.totalorder %v185, %v191
    %vm193 = vcmp.lt.s32.totalorder %v186, %v191
    %vm194 = vcmp.lt.s32.totalorder %v187, %v191
    %vm195 = vcmp.lt.s32.totalorder %v188, %v191
    %vm196 = vcmp.ne.f32.partialorder %v83, -1.0
    %vm197 = vcmp.ne.f32.partialorder %v84, -1.0
    %vm198 = vcmp.ne.f32.partialorder %v85, -1.0
    %vm199 = vcmp.ne.f32.partialorder %v86, -1.0
    %vm200 = vmand %vm192, %vm196
    %vm201 = vmand %vm193, %vm197
    %vm202 = vmand %vm194, %vm198
    %vm203 = vmand %vm195, %vm199
    %v204 = vld [vmem:[#allocation2] sm:$0xff]
    %v205 = vld [vmem:[#allocation2 + $0x8] sm:$0xff]
    %v206 = vld [vmem:[#allocation2 + $0x10] sm:$0xff]
    %v207 = vld [vmem:[#allocation2 + $0x18] sm:$0xff]
    %v208 = vsel %vm200, %v179, 0.0
    %v209 = vsel %vm201, %v180, 0.0
    %v210 = vsel %vm202, %v181, 0.0
    %v211 = vsel %vm203, %v182, 0.0
    %v212 = vadd.f32 %v204, %v208
    %v213 = vadd.f32 %v205, %v209
    %v214 = vadd.f32 %v206, %v210
    %v215 = vadd.f32 %v207, %v211
    %216 = vst [vmem:[#allocation2] sm:$0xff] %v212
    %217 = vst [vmem:[#allocation2 + $0x8] sm:$0xff] %v213
    %218 = vst [vmem:[#allocation2 + $0x10] sm:$0xff] %v214
    %219 = vst [vmem:[#allocation2 + $0x18] sm:$0xff] %v215
    // Predicated region
    $region22: #{tpu_custom_call.1} parent=1 // pred_check
      %p220 = pneg %p56
    $region23: #{tpu_custom_call.1} parent=1 // pred_check_branch
      %222 = sbr.rel (%p220) target = $region25
    $region24: #{tpu_custom_call.1} parent=1 // pred_region
      %v223 = vld [vmem:[#allocation2] sm:$0xff]
      %v224 = vld [vmem:[#allocation2 + $0x8] sm:$0xff]
      %v225 = vld [vmem:[#allocation2 + $0x10] sm:$0xff]
      %v226 = vld [vmem:[#allocation2 + $0x18] sm:$0xff]
      %v227 = vadd.f32 %v223, %v224
      %v228 = vadd.f32 %v227, %v225
      %v229 = vadd.f32 %v228, %v226
      %230 = vadd.xlane.f32.xlu0 %v229
      %v231 = vpop.xlane.xlu0 %230
      %v232 = vrot.slane %v231, 4
      %v233 = vadd.f32 %v231, %v232
      %v234 = vrot.slane %v233, 2
      %v235 = vadd.f32 %v233, %v234
      %v236 = vrot.slane %v235, 1
      %v237 = vadd.f32 %v235, %v236
      %s238 = vtos %v237
      %v239 = vstv %s238
      %240 = vst [vmem:[#allocation8] sm:$0xff] %v239
    $region25: #{tpu_custom_call.1} parent=1 // pred_fallthru
      _
    // Predicated region
    $region26: #{tpu_custom_call.1} parent=1 // pred_check
      _
    $region27: #{tpu_custom_call.1} parent=1 // pred_check_branch
      %242 = sbr.rel (0) target = $region29
    $region28: #{tpu_custom_call.1} parent=1 // pred_region
      %s244 = ssub.s32 128, 128
      %245 = vsyncadd [#allocation5], %s244
      %s247 = sshll.u32 [#allocation8], 4
      %s248 = int_to_ptr.vmem [resolvable:$true] %s247
      %250 = dma.vmem_to_hbm [thread:$0]  %s248, 128, %s2, [#allocation5]
    $region29: #{tpu_custom_call.1} parent=1 // pred_fallthru
      _
    // Predicated region
    $region30: #{tpu_custom_call.1} parent=1 // pred_check
      _
    $region31: #{tpu_custom_call.1} parent=1 // pred_check_branch
      %252 = sbr.rel (0) target = $region33
    $region32: #{tpu_custom_call.1} parent=1 // pred_region
      %253 = dma.done [#allocation5], 128
    $region33: #{tpu_custom_call.1} parent=1 // pred_fallthru
      _
    %254 = vsyncpa [#allocation4], 1
    %255 = vsyncpa [#allocation7], 1
    %256 = vsyncpa [#allocation5], 1

</llo_original>
